<compile_context>
chip_gen: v7x
topology: tpu7x:2x2x1
jax: 0.10.0
libtpu: 0.0.40
codegen_flags: <defaults>
</compile_context>

<pallas_src>
import functools

import jax
import jax.numpy as jnp
from jax.experimental import pallas as pl
from jax.experimental.pallas import tpu as pltpu

H1_PAD = 512  # 400 padded up to a multiple of 128 lanes
H2_PAD = 384  # 300 padded up to a multiple of 128 lanes


def critic_kernel(x_ref, u_ref, w1x_ref, w1u_ref, b1_ref,
                  w2_ref, b2_ref, w3_ref, b3_ref, out_ref):
    # Compute dtype follows the (pre-cast) weights: bf16 for speed, f32 for parity.
    cdt = w1x_ref.dtype

    # Layer 1: x @ w1x + u @ w1u  (no materialized concat), f32 accumulation.
    h1 = jnp.dot(x_ref[...].astype(cdt), w1x_ref[...],
                 preferred_element_type=jnp.float32)
    h1 = h1 + jnp.dot(u_ref[...].astype(cdt), w1u_ref[...],
                      preferred_element_type=jnp.float32)
    h1 = jnp.maximum(h1 + b1_ref[...], 0.0)

    # Layer 2: the dominant 512x384 matmul (MXU), bf16 inputs / f32 accumulate.
    h2 = jnp.dot(h1.astype(cdt), w2_ref[...],
                 preferred_element_type=jnp.float32)
    h2 = jnp.maximum(h2 + b2_ref[...], 0.0)

    # Layer 3: Linear(300, 1) as broadcast-mul + cross-lane reduce (VPU + XLU),
    # keeping the N=1 projection off the MXU. b3 is an SMEM scalar.
    q = jnp.sum(h2 * w3_ref[...], axis=-1, keepdims=True) + b3_ref[0]
    out_ref[...] = q.astype(out_ref.dtype)


def prepare_critic_params(params, state_dim, use_bf16=True):
    """One-time weight prep: pad hidden dims to lane multiples, split w1 into
    x/u halves, and cast matmul weights to bf16. Call ONCE, not per forward."""
    w1, b1, w2, b2, w3, b3 = params
    H1 = w1.shape[1]
    H2 = w2.shape[1]
    wdt = jnp.bfloat16 if use_bf16 else jnp.float32

    w1p = jnp.pad(w1, ((0, 0), (0, H1_PAD - H1))).astype(wdt)
    b1p = jnp.pad(b1.reshape(1, -1), ((0, 0), (0, H1_PAD - H1))).astype(jnp.float32)
    w2p = jnp.pad(w2, ((0, H1_PAD - H1), (0, H2_PAD - H2))).astype(wdt)
    b2p = jnp.pad(b2.reshape(1, -1), ((0, 0), (0, H2_PAD - H2))).astype(jnp.float32)
    w3p = jnp.pad(w3.reshape(1, -1), ((0, 0), (0, H2_PAD - H2))).astype(jnp.float32)
    b3p = b3.reshape(1).astype(jnp.float32)

    return (w1p[:state_dim], w1p[state_dim:], b1p, w2p, b2p, w3p, b3p)


def _round_up(x, m):
    return ((x + m - 1) // m) * m


def _choose_block_b(B, cap):
    """Batch tile: multiple of 8, <= cap, and >= 2 grid steps for large batches
    so the 'parallel' grid axis actually shards across both v7x TensorCores."""
    B8 = _round_up(B, 8)
    if B8 <= 256:
        return B8                           # tiny batch: one small tile
    bb = _round_up(-(-B8 // 2), 256)        # aim for >= 2 tiles, 256-aligned
    return min(int(cap), bb)


@functools.partial(jax.jit, static_argnames=("block_b",))
def critic_forward(x, u, prepared_params, block_b=1024):
    """Pallas forward pass of the DDPG Critic. Returns (B, 1) f32 Q-values.
    `prepared_params` must come from prepare_critic_params()."""
    w1x, w1u, b1, w2, b2, w3, b3 = prepared_params
    B, state_dim = x.shape
    action_dim = u.shape[1]

    bb = _choose_block_b(B, block_b)
    B_pad = pl.cdiv(B, bb) * bb
    if B_pad != B:
        x = jnp.pad(x, ((0, B_pad - B), (0, 0)))
        u = jnp.pad(u, ((0, B_pad - B), (0, 0)))
    grid = (B_pad // bb,)

    def wspec(shape):  # weights/biases: resident in VMEM across the whole grid
        return pl.BlockSpec(shape, lambda i: (0, 0))

    flops = 2 * B_pad * ((state_dim + action_dim) * H1_PAD + H1_PAD * H2_PAD + H2_PAD)
    itemsize = jnp.dtype(w2.dtype).itemsize
    bytes_accessed = (
        4 * B_pad * (state_dim + action_dim + 1)
        + itemsize * ((state_dim + action_dim) * H1_PAD + H1_PAD * H2_PAD)
        + 4 * (H1_PAD + 2 * H2_PAD + 1)
    )

    out = pl.pallas_call(
        critic_kernel,
        out_shape=jax.ShapeDtypeStruct((B_pad, 1), jnp.float32),
        grid_spec=pltpu.PrefetchScalarGridSpec(
            num_scalar_prefetch=0,
            grid=grid,
            in_specs=[
                pl.BlockSpec((bb, state_dim), lambda i: (i, 0)),    # x tile
                pl.BlockSpec((bb, action_dim), lambda i: (i, 0)),   # u tile
                wspec((state_dim, H1_PAD)),                         # w1x
                wspec((action_dim, H1_PAD)),                        # w1u
                wspec((1, H1_PAD)),                                 # b1
                wspec((H1_PAD, H2_PAD)),                            # w2
                wspec((1, H2_PAD)),                                 # b2
                wspec((1, H2_PAD)),                                 # w3 row
                pl.BlockSpec(memory_space=pltpu.MemorySpace.SMEM),  # b3 scalar
            ],
            out_specs=pl.BlockSpec((bb, 1), lambda i: (i, 0)),
        ),
        compiler_params=pltpu.CompilerParams(
            dimension_semantics=("parallel",),
            vmem_limit_bytes=32 * 1024 * 1024,
        ),
        cost_estimate=pl.CostEstimate(
            flops=flops, transcendentals=0, bytes_accessed=bytes_accessed
        ),
    )(x, u, w1x, w1u, b1, w2, b2, w3, b3)

    return out[:B]


def init_critic_params(key, state_dim, action_dim):
    """Deterministic synthetic parameters matching nn.Linear shapes.
    Weights are stored transposed relative to PyTorch: (in, out)."""
    k1, k2, k3, k4, k5, k6 = jax.random.split(key, 6)
    in1 = state_dim + action_dim
    w1 = jax.random.normal(k1, (in1, 400), jnp.float32) * (1.0 / jnp.sqrt(in1))
    b1 = jax.random.normal(k2, (1, 400), jnp.float32) * 0.01
    w2 = jax.random.normal(k3, (400, 300), jnp.float32) * (1.0 / jnp.sqrt(400.0))
    b2 = jax.random.normal(k4, (1, 300), jnp.float32) * 0.01
    w3 = jax.random.normal(k5, (300, 1), jnp.float32) * (1.0 / jnp.sqrt(300.0))
    b3 = jax.random.normal(k6, (1,), jnp.float32) * 0.01
    return (w1, b1, w2, b2, w3, b3)


def critic_forward_ref(x, u, params):
    """Pure-JAX f32 reference for correctness checking."""
    w1, b1, w2, b2, w3, b3 = params
    xu = jnp.concatenate([x, u], axis=1)
    h1 = jnp.maximum(xu @ w1 + b1, 0.0)
    h2 = jnp.maximum(h1 @ w2 + b2, 0.0)
    return h2 @ w3 + b3


if __name__ == "__main__":
    key = jax.random.PRNGKey(0)
    kx, ku, kp, kx2, ku2 = jax.random.split(key, 5)

    batch, state_dim, action_dim = 2, 8, 4
    x = jax.random.normal(kx, (batch, state_dim), jnp.float32)
    u = jax.random.normal(ku, (batch, action_dim), jnp.float32)
    params = init_critic_params(kp, state_dim, action_dim)

    # Weight prep is done ONCE (hoisted out of the per-call path).
    prep_bf16 = prepare_critic_params(params, state_dim, use_bf16=True)
    prep_f32 = prepare_critic_params(params, state_dim, use_bf16=False)

    # Fast (bf16-matmul) path — default.
    q = critic_forward(x, u, prep_bf16)
    jax.block_until_ready(q)

    q_ref = critic_forward_ref(x, u, params)
    assert q.shape == (batch, 1)
    assert jnp.allclose(q, q_ref, atol=2e-2, rtol=2e-2), "bf16 path mismatch"

    # Exact-f32 path: strict parity with the PyTorch/JAX reference.
    q32 = critic_forward(x, u, prep_f32)
    jax.block_until_ready(q32)
    assert jnp.allclose(q32, q_ref, atol=1e-4, rtol=1e-4), "f32 path mismatch"

    # Multi-tile / ragged-batch check (exercises the 2-step 'parallel' grid).
    b2_ = 300
    x2 = jax.random.normal(kx2, (b2_, state_dim), jnp.float32)
    u2 = jax.random.normal(ku2, (b2_, action_dim), jnp.float32)
    q2 = critic_forward(x2, u2, prep_bf16)
    jax.block_until_ready(q2)
    q2_ref = critic_forward_ref(x2, u2, params)
    assert q2.shape == (b2_, 1)
    assert jnp.allclose(q2, q2_ref, atol=2e-2, rtol=2e-2), "multi-tile mismatch"

    print("KERNEL_OK")
</pallas_src>

<mosaic_0001>
module attributes {stable_mosaic.version = 11 : i64} {
  func.func @critic_kernel(%arg0: i32, %arg1: memref<8x8xf32, #tpu.memory_space<vmem>>, %arg2: memref<8x4xf32, #tpu.memory_space<vmem>>, %arg3: memref<8x512xbf16, #tpu.memory_space<vmem>>, %arg4: memref<4x512xbf16, #tpu.memory_space<vmem>>, %arg5: memref<1x512xf32, #tpu.memory_space<vmem>>, %arg6: memref<512x384xbf16, #tpu.memory_space<vmem>>, %arg7: memref<1x384xf32, #tpu.memory_space<vmem>>, %arg8: memref<1x384xf32, #tpu.memory_space<vmem>>, %arg9: memref<1xf32, #tpu.memory_space<smem>>, %arg10: memref<8x1xf32, #tpu.memory_space<vmem>>) attributes {dimension_semantics = [#tpu.dimension_semantics<parallel>], iteration_bounds = array<i64: 1>, scalar_prefetch = 0 : i64, scratch_operands = 0 : i64, tpu.core_type = #tpu.core_type<tc>, window_params = [{transform_indices = @transform_0, window_bounds = array<i64: 8, 8>}, {transform_indices = @transform_1, window_bounds = array<i64: 8, 4>}, {pipeline_mode = #tpu.pipeline_mode<synchronous>, transform_indices = @transform_2, window_bounds = array<i64: 8, 512>}, {pipeline_mode = #tpu.pipeline_mode<synchronous>, transform_indices = @transform_3, window_bounds = array<i64: 4, 512>}, {pipeline_mode = #tpu.pipeline_mode<synchronous>, transform_indices = @transform_4, window_bounds = array<i64: 1, 512>}, {pipeline_mode = #tpu.pipeline_mode<synchronous>, transform_indices = @transform_5, window_bounds = array<i64: 512, 384>}, {pipeline_mode = #tpu.pipeline_mode<synchronous>, transform_indices = @transform_6, window_bounds = array<i64: 1, 384>}, {pipeline_mode = #tpu.pipeline_mode<synchronous>, transform_indices = @transform_7, window_bounds = array<i64: 1, 384>}, {transform_indices = @transform_8, window_bounds = array<i64: 1>}, {transform_indices = @transform_9, window_bounds = array<i64: 8, 1>}]} {
    %c0 = arith.constant 0 : index
    %c0_0 = arith.constant 0 : index
    %0 = vector.load %arg1[%c0, %c0_0] : memref<8x8xf32, #tpu.memory_space<vmem>>, vector<8x8xf32>
    %1 = arith.truncf %0 : vector<8x8xf32> to vector<8x8xbf16>
    %c0_1 = arith.constant 0 : index
    %c0_2 = arith.constant 0 : index
    %2 = vector.load %arg3[%c0_1, %c0_2] : memref<8x512xbf16, #tpu.memory_space<vmem>>, vector<8x512xbf16>
    %cst = arith.constant dense<0.000000e+00> : vector<8x512xf32>
    %3 = tpu.matmul %1, %2, %cst {dimension_numbers = #tpu.dot_dimension_numbers<[1], [0], [0], [1], [0, 0, 1, 1], [], []>} : vector<8x8xbf16>, vector<8x512xbf16>, vector<8x512xf32> -> vector<8x512xf32>
    %c0_3 = arith.constant 0 : index
    %c0_4 = arith.constant 0 : index
    %4 = vector.load %arg2[%c0_3, %c0_4] : memref<8x4xf32, #tpu.memory_space<vmem>>, vector<8x4xf32>
    %5 = arith.truncf %4 : vector<8x4xf32> to vector<8x4xbf16>
    %c0_5 = arith.constant 0 : index
    %c0_6 = arith.constant 0 : index
    %6 = vector.load %arg4[%c0_5, %c0_6] : memref<4x512xbf16, #tpu.memory_space<vmem>>, vector<4x512xbf16>
    %cst_7 = arith.constant dense<0.000000e+00> : vector<8x512xf32>
    %7 = tpu.matmul %5, %6, %cst_7 {dimension_numbers = #tpu.dot_dimension_numbers<[1], [0], [0], [1], [0, 0, 1, 1], [], []>} : vector<8x4xbf16>, vector<4x512xbf16>, vector<8x512xf32> -> vector<8x512xf32>
    %8 = arith.addf %3, %7 : vector<8x512xf32>
    %c0_8 = arith.constant 0 : index
    %c0_9 = arith.constant 0 : index
    %9 = vector.load %arg5[%c0_8, %c0_9] : memref<1x512xf32, #tpu.memory_space<vmem>>, vector<1x512xf32>
    %10 = vector.broadcast %9 : vector<1x512xf32> to vector<8x512xf32>
    %11 = arith.addf %8, %10 : vector<8x512xf32>
    %cst_10 = arith.constant 0.000000e+00 : f32
    %12 = vector.broadcast %cst_10 : f32 to vector<8x512xf32>
    %13 = arith.maximumf %11, %12 : vector<8x512xf32>
    %14 = arith.truncf %13 : vector<8x512xf32> to vector<8x512xbf16>
    %c0_11 = arith.constant 0 : index
    %c0_12 = arith.constant 0 : index
    %15 = vector.load %arg6[%c0_11, %c0_12] : memref<512x384xbf16, #tpu.memory_space<vmem>>, vector<512x384xbf16>
    %cst_13 = arith.constant dense<0.000000e+00> : vector<8x384xf32>
    %16 = tpu.matmul %14, %15, %cst_13 {dimension_numbers = #tpu.dot_dimension_numbers<[1], [0], [0], [1], [0, 0, 1, 1], [], []>} : vector<8x512xbf16>, vector<512x384xbf16>, vector<8x384xf32> -> vector<8x384xf32>
    %c0_14 = arith.constant 0 : index
    %c0_15 = arith.constant 0 : index
    %17 = vector.load %arg7[%c0_14, %c0_15] : memref<1x384xf32, #tpu.memory_space<vmem>>, vector<1x384xf32>
    %18 = vector.broadcast %17 : vector<1x384xf32> to vector<8x384xf32>
    %19 = arith.addf %16, %18 : vector<8x384xf32>
    %cst_16 = arith.constant 0.000000e+00 : f32
    %20 = vector.broadcast %cst_16 : f32 to vector<8x384xf32>
    %21 = arith.maximumf %19, %20 : vector<8x384xf32>
    %c0_17 = arith.constant 0 : index
    %c0_18 = arith.constant 0 : index
    %22 = vector.load %arg8[%c0_17, %c0_18] : memref<1x384xf32, #tpu.memory_space<vmem>>, vector<1x384xf32>
    %23 = vector.broadcast %22 : vector<1x384xf32> to vector<8x384xf32>
    %24 = arith.mulf %21, %23 : vector<8x384xf32>
    %cst_19 = arith.constant dense<0.000000e+00> : vector<8xf32>
    %25 = vector.multi_reduction <add>, %24, %cst_19 [1] : vector<8x384xf32> to vector<8xf32>
    %26 = vector.shape_cast %25 : vector<8xf32> to vector<8x1xf32>
    %c0_20 = arith.constant 0 : index
    %27 = memref.load %arg9[%c0_20] : memref<1xf32, #tpu.memory_space<smem>>
    %28 = vector.broadcast %27 : f32 to vector<8x1xf32>
    %29 = arith.addf %26, %28 : vector<8x1xf32>
    %c0_21 = arith.constant 0 : index
    %c0_22 = arith.constant 0 : index
    %30 = vector.load %arg10[%c0_21, %c0_22] : memref<8x1xf32, #tpu.memory_space<vmem>>, vector<8x1xf32>
    tpu.vector_store %arg10[%c0_21, %c0_22], %29 {strides = array<i32>} : memref<8x1xf32, #tpu.memory_space<vmem>>, vector<8x1xf32>,
    return
  }
  func.func @transform_0(%arg0: i32) -> (i32, i32) {
    %c0_i32 = arith.constant 0 : i32
    %c0_i32_0 = arith.constant 0 : i32
    return %arg0, %c0_i32 : i32, i32
  }
  func.func @transform_1(%arg0: i32) -> (i32, i32) {
    %c0_i32 = arith.constant 0 : i32
    %c0_i32_0 = arith.constant 0 : i32
    return %arg0, %c0_i32 : i32, i32
  }
  func.func @transform_2(%arg0: i32) -> (i32, i32) {
    %c0_i32 = arith.constant 0 : i32
    %c0_i32_0 = arith.constant 0 : i32
    %c0_i32_1 = arith.constant 0 : i32
    return %c0_i32, %c0_i32_0 : i32, i32
  }
  func.func @transform_3(%arg0: i32) -> (i32, i32) {
    %c0_i32 = arith.constant 0 : i32
    %c0_i32_0 = arith.constant 0 : i32
    %c0_i32_1 = arith.constant 0 : i32
    return %c0_i32, %c0_i32_0 : i32, i32
  }
  func.func @transform_4(%arg0: i32) -> (i32, i32) {
    %c0_i32 = arith.constant 0 : i32
    %c0_i32_0 = arith.constant 0 : i32
    %c0_i32_1 = arith.constant 0 : i32
    return %c0_i32, %c0_i32_0 : i32, i32
  }
  func.func @transform_5(%arg0: i32) -> (i32, i32) {
    %c0_i32 = arith.constant 0 : i32
    %c0_i32_0 = arith.constant 0 : i32
    %c0_i32_1 = arith.constant 0 : i32
    return %c0_i32, %c0_i32_0 : i32, i32
  }
  func.func @transform_6(%arg0: i32) -> (i32, i32) {
    %c0_i32 = arith.constant 0 : i32
    %c0_i32_0 = arith.constant 0 : i32
    %c0_i32_1 = arith.constant 0 : i32
    return %c0_i32, %c0_i32_0 : i32, i32
  }
  func.func @transform_7(%arg0: i32) -> (i32, i32) {
    %c0_i32 = arith.constant 0 : i32
    %c0_i32_0 = arith.constant 0 : i32
    %c0_i32_1 = arith.constant 0 : i32
    return %c0_i32, %c0_i32_0 : i32, i32
  }
  func.func @transform_8(%arg0: i32) -> i32 {
    %c0_i32 = arith.constant 0 : i32
    %c0_i32_0 = arith.constant 0 : i32
    return %c0_i32 : i32
  }
  func.func @transform_9(%arg0: i32) -> (i32, i32) {
    %c0_i32 = arith.constant 0 : i32
    %c0_i32_0 = arith.constant 0 : i32
    return %arg0, %c0_i32 : i32, i32
  }
}

</mosaic_0001>

<llo_original>
// kernel: critic_forward.1
$region0: #{critic_forward.1}
  #allocation0 [shape = 'u32[]', space=smem, size = 0x4, offset = 0x4, fixed_abs, tag = 'smem constant byte address 0x4 - core index']
  #allocation1 [shape = 'u32[144,128]{1,0:T(1,128)}', space=vmem, size = 0x12000, scoped, tag = 'internal scratch']
  #allocation2 [shape = 'f32[1]{0:T(128)S(6)}', space=smem, size = 0x200, scoped, tag = 'scoped memory for critic_forward.1']
  %s0 = inlined_call_operand.vmem [shape: f32[8,8], index: 0, kind: input, shape index: {}]
  %s1 = inlined_call_operand.vmem [shape: f32[8,4], index: 1, kind: input, shape index: {}]
  %s2 = inlined_call_operand.vmem [shape: bf16[8,512], index: 2, kind: input, shape index: {}]
  %s3 = inlined_call_operand.vmem [shape: bf16[4,512], index: 3, kind: input, shape index: {}]
  %s4 = inlined_call_operand.vmem [shape: f32[1,512], index: 4, kind: input, shape index: {}]
  %s5 = inlined_call_operand.hbm [shape: bf16[512,384], index: 5, kind: input, shape index: {}]
  %s6 = inlined_call_operand.vmem [shape: f32[1,384], index: 6, kind: input, shape index: {}]
  %s7 = inlined_call_operand.vmem [shape: f32[1,384], index: 7, kind: input, shape index: {}]
  %s8 = inlined_call_operand.<no memory space> [shape: f32[1], index: 8, kind: input, shape index: {}]
  %s9 = inlined_call_operand.vmem [shape: f32[8,1], index: 9, kind: output, shape index: {}]
  %s10 = sld [smem:[#allocation0]]
  $region50: #{critic_forward.1} parent=0
    _
  %s12 = ssub.s32 1, %s10
  %s13 = scalar_select 0, %s12, %s10
  %14 = sst [smem:[#allocation2]] %s8
  $region1: #{critic_forward.1} parent=0
    #allocation3 [shape = 'u8[393216]{0}', space=vmem, size = 0x60000, scoped, tag = 'input window, operand 5, single buffered']
    #allocation4 [shape = 's32[1]{0}', space=sflag, size = 0x4, scoped, tag = 'scoped memory for critic_forward.1']
    %15 = vsyncpa [#allocation4], 0
    // Predicated region
    $region2: #{critic_forward.1} parent=1 // pred_check
      _
    $region3: #{critic_forward.1} parent=1 // pred_check_branch
      %17 = sbr.rel (0) target = $region5
    $region4: #{critic_forward.1} parent=1 // pred_region
      _
    $region5: #{critic_forward.1} parent=1 // pred_fallthru
      _
    // Predicated region
    $region6: #{critic_forward.1} parent=1 // pred_check
      _
    $region7: #{critic_forward.1} parent=1 // pred_check_branch
      %19 = sbr.rel (0) target = $region9
    $region8: #{critic_forward.1} parent=1 // pred_region
      _
    $region9: #{critic_forward.1} parent=1 // pred_fallthru
      _
    // Predicated region
    $region10: #{critic_forward.1} parent=1 // pred_check
      _
    $region11: #{critic_forward.1} parent=1 // pred_check_branch
      %21 = sbr.rel (0) target = $region13
    $region12: #{critic_forward.1} parent=1 // pred_region
      _
    $region13: #{critic_forward.1} parent=1 // pred_fallthru
      _
    // Predicated region
    $region14: #{critic_forward.1} parent=1 // pred_check
      _
    $region15: #{critic_forward.1} parent=1 // pred_check_branch
      %23 = sbr.rel (0) target = $region17
    $region16: #{critic_forward.1} parent=1 // pred_region
      _
    $region17: #{critic_forward.1} parent=1 // pred_fallthru
      _
    // Predicated region
    $region18: #{critic_forward.1} parent=1 // pred_check
      _
    $region19: #{critic_forward.1} parent=1 // pred_check_branch
      %25 = sbr.rel (0) target = $region21
    $region20: #{critic_forward.1} parent=1 // pred_region
      _
    $region21: #{critic_forward.1} parent=1 // pred_fallthru
      _
    // Predicated region
    $region22: #{critic_forward.1} parent=1 // pred_check
      _
    $region23: #{critic_forward.1} parent=1 // pred_check_branch
      %27 = sbr.rel (0) target = $region25
    $region24: #{critic_forward.1} parent=1 // pred_region
      %s29 = ssub.s32 12288, 12288
      %30 = vsyncadd [#allocation4], %s29
      %s31 = sshll.u32 [#allocation3], 4
      %s32 = int_to_ptr.vmem [resolvable:$true] %s31
      %37 = dma.hbm_to_vmem [thread:$0]  %s5, 12288, %s32, [#allocation4], 192, 192, 12
    $region25: #{critic_forward.1} parent=1 // pred_fallthru
      _
    // Predicated region
    $region26: #{critic_forward.1} parent=1 // pred_check
      _
    $region27: #{critic_forward.1} parent=1 // pred_check_branch
      %39 = sbr.rel (0) target = $region29
    $region28: #{critic_forward.1} parent=1 // pred_region
      _
    $region29: #{critic_forward.1} parent=1 // pred_fallthru
      _
    // Predicated region
    $region30: #{critic_forward.1} parent=1 // pred_check
      _
    $region31: #{critic_forward.1} parent=1 // pred_check_branch
      %41 = sbr.rel (0) target = $region33
    $region32: #{critic_forward.1} parent=1 // pred_region
      _
    $region33: #{critic_forward.1} parent=1 // pred_fallthru
      _
    // Predicated region
    $region34: #{critic_forward.1} parent=1 // pred_check
      _
    $region35: #{critic_forward.1} parent=1 // pred_check_branch
      %43 = sbr.rel (0) target = $region37
    $region36: #{critic_forward.1} parent=1 // pred_region
      _
    $region37: #{critic_forward.1} parent=1 // pred_fallthru
      _
    // Predicated region
    $region38: #{critic_forward.1} parent=1 // pred_check
      _
    $region39: #{critic_forward.1} parent=1 // pred_check_branch
      %45 = sbr.rel (0) target = $region41
    $region40: #{critic_forward.1} parent=1 // pred_region
      %46 = dma.done [#allocation4], 12288
    $region41: #{critic_forward.1} parent=1 // pred_fallthru
      _
    %v48 = vld [vmem:[%s0] sm:$0xff]
    %v49 = vpack.c.bf16 %v48, %v48
    %v50 = vld [vmem:[%s2] sm:$0xff]
    %v51 = vld [vmem:[%s2 + $0x8] sm:$0xff]
    %v52 = vld [vmem:[%s1] sm:$0xff]
    %v53 = vpack.c.bf16 %v52, %v52
    %v54 = vld [vmem:[%s3] sm:$0xff]
    %v56 = vcombine.high %v54, %v54
    %v58 = vunpack.c.l.s4 1983009808
    %v59 = vunpack.c.0.s8 %v58
    %v60 = vlaneseq
    %v61 = vshrl.u32 %v60, 7
    %v62 = vsub.s32 %v59, %v61
    %v63 = vrot.slane %v54, %v62
    %v65 = vunpack.c.l.s4 1983009808
    %v66 = vunpack.c.0.s8 %v65
    %v67 = vlaneseq
    %v68 = vshrl.u32 %v67, 7
    %v69 = vsub.s32 %v66, %v68
    %v70 = vrot.slane %v56, %v69
    %v71 = vcombine.high %v63, %v63
    %v72 = vcombine.high %v70, %v70
    %vm73 = vcmask 31744
    %v75 = vsel %vm73, %v53, 0
    %vm77 = vcmask 1041408
    %v79 = vsel %vm77, %v63, 0
    %v82 = vsel %vm77, %v71, 0
    %v85 = vsel %vm77, %v70, 0
    %v88 = vsel %vm77, %v72, 0
    %90 = vmatprep.subr.bf16.mxu0 %v82
    %91 = vmatpush1.bf16.msra.mxu0 %v79
    %92 = vmatprep.subr.bf16.mxu0 0
    %93 = vmatpush1.bf16.msra.mxu0 0
    %94 = vmatprep.subr.bf16.mxu0 0
    %95 = vmatpush1.bf16.msra.mxu0 0
    %96 = vmatprep.subr.bf16.mxu0 0
    %97 = vmatpush1.bf16.msra.mxu0 0
    %98 = vmatprep.subr.bf16.mxu0 0
    %99 = vmatpush1.bf16.msra.mxu0 0
    %100 = vmatprep.subr.bf16.mxu0 0
    %101 = vmatpush1.bf16.msra.mxu0 0
    %102 = vmatprep.subr.bf16.mxu0 0
    %103 = vmatpush1.bf16.msra.mxu0 0
    %104 = vmatprep.subr.bf16.mxu0 0
    %105 = vmatpush1.bf16.msra.mxu0 0
    %106 = vmatprep.subr.bf16.mxu0 0
    %107 = vmatpush1.bf16.msra.mxu0 0
    %108 = vmatprep.subr.bf16.mxu0 0
    %109 = vmatpush1.bf16.msra.mxu0 0
    %110 = vmatprep.subr.bf16.mxu0 0
    %111 = vmatpush1.bf16.msra.mxu0 0
    %112 = vmatprep.subr.bf16.mxu0 0
    %113 = vmatpush1.bf16.msra.mxu0 0
    %114 = vmatprep.subr.bf16.mxu0 0
    %115 = vmatpush1.bf16.msra.mxu0 0
    %116 = vmatprep.subr.bf16.mxu0 0
    %117 = vmatpush1.bf16.msra.mxu0 0
    %118 = vmatprep.subr.bf16.mxu0 0
    %119 = vmatpush1.bf16.msra.mxu0 0
    %120 = vmatprep.subr.bf16.mxu0 0
    %121 = vmatpush1.bf16.msra.mxu0 0
    %122 = vmatprep.mubr.bf16.mxu0 0
    %123 = vmatmul.mubr.bf16.gmra.mrb[0].mxu0 %v75
    %v124 = vpop.f32.mrb[0].mxu0
    %v125 = vadd.f32 0.0, %v124
    %v126 = vpop.f32.mrb[0].mxu0
    %v127 = vadd.f32 0.0, %v126
    %v128 = vpop.f32.mrb[0].mxu0
    %v129 = vpop.f32.mrb[0].mxu0
    %130 = vdwg.mxu0
    %131 = vmatprep.subr.bf16.mxu0 %v88
    %132 = vmatpush1.bf16.msra.mxu0 %v85
    %133 = vmatprep.subr.bf16.mxu0 0
    %134 = vmatpush1.bf16.msra.mxu0 0
    %135 = vmatprep.subr.bf16.mxu0 0
    %136 = vmatpush1.bf16.msra.mxu0 0
    %137 = vmatprep.subr.bf16.mxu0 0
    %138 = vmatpush1.bf16.msra.mxu0 0
    %139 = vmatprep.subr.bf16.mxu0 0
    %140 = vmatpush1.bf16.msra.mxu0 0
    %141 = vmatprep.subr.bf16.mxu0 0
    %142 = vmatpush1.bf16.msra.mxu0 0
    %143 = vmatprep.subr.bf16.mxu0 0
    %144 = vmatpush1.bf16.msra.mxu0 0
    %145 = vmatprep.subr.bf16.mxu0 0
    %146 = vmatpush1.bf16.msra.mxu0 0
    %147 = vmatprep.subr.bf16.mxu0 0
    %148 = vmatpush1.bf16.msra.mxu0 0
    %149 = vmatprep.subr.bf16.mxu0 0
    %150 = vmatpush1.bf16.msra.mxu0 0
    %151 = vmatprep.subr.bf16.mxu0 0
    %152 = vmatpush1.bf16.msra.mxu0 0
    %153 = vmatprep.subr.bf16.mxu0 0
    %154 = vmatpush1.bf16.msra.mxu0 0
    %155 = vmatprep.subr.bf16.mxu0 0
    %156 = vmatpush1.bf16.msra.mxu0 0
    %157 = vmatprep.subr.bf16.mxu0 0
    %158 = vmatpush1.bf16.msra.mxu0 0
    %159 = vmatprep.subr.bf16.mxu0 0
    %160 = vmatpush1.bf16.msra.mxu0 0
    %161 = vmatprep.subr.bf16.mxu0 0
    %162 = vmatpush1.bf16.msra.mxu0 0
    %163 = vmatprep.mubr.bf16.mxu0 0
    %164 = vmatmul.mubr.bf16.gmra.mrb[0].mxu0 %v75
    %v165 = vpop.f32.mrb[0].mxu0
    %v166 = vadd.f32 0.0, %v165
    %v167 = vpop.f32.mrb[0].mxu0
    %v168 = vadd.f32 0.0, %v167
    %v169 = vpop.f32.mrb[0].mxu0
    %v170 = vpop.f32.mrb[0].mxu0
    %171 = vdwg.mxu0
    %v174 = vunpack.c.l.b16 %v50
    %v175 = vunpack.c.h.b16 %v50
    %v176 = vunpack.c.l.b16 %v51
    %v177 = vunpack.c.h.b16 %v51
    %v178 = vpack.c.b16 %v174, %v174
    %v179 = vpack.c.b16 %v175, %v175
    %v180 = vpack.c.b16 %v176, %v176
    %v181 = vpack.c.b16 %v177, %v177
    %vm182 = vcmask 64512
    %v184 = vsel %vm182, %v49, 0
    %vm186 = vcmask 1043456
    %v188 = vsel %vm186, %v178, 0
    %v191 = vsel %vm186, %v179, 0
    %v194 = vsel %vm186, %v180, 0
    %v197 = vsel %vm186, %v181, 0
    %199 = vmatprep.subr.bf16.mxu0 %v191
    %200 = vmatpush1.bf16.msra.mxu0 %v188
    %201 = vmatprep.subr.bf16.mxu0 0
    %202 = vmatpush1.bf16.msra.mxu0 0
    %203 = vmatprep.subr.bf16.mxu0 0
    %204 = vmatpush1.bf16.msra.mxu0 0
    %205 = vmatprep.subr.bf16.mxu0 0
    %206 = vmatpush1.bf16.msra.mxu0 0
    %207 = vmatprep.subr.bf16.mxu0 0
    %208 = vmatpush1.bf16.msra.mxu0 0
    %209 = vmatprep.subr.bf16.mxu0 0
    %210 = vmatpush1.bf16.msra.mxu0 0
    %211 = vmatprep.subr.bf16.mxu0 0
    %212 = vmatpush1.bf16.msra.mxu0 0
    %213 = vmatprep.subr.bf16.mxu0 0
    %214 = vmatpush1.bf16.msra.mxu0 0
    %215 = vmatprep.subr.bf16.mxu0 0
    %216 = vmatpush1.bf16.msra.mxu0 0
    %217 = vmatprep.subr.bf16.mxu0 0
    %218 = vmatpush1.bf16.msra.mxu0 0
    %219 = vmatprep.subr.bf16.mxu0 0
    %220 = vmatpush1.bf16.msra.mxu0 0
    %221 = vmatprep.subr.bf16.mxu0 0
    %222 = vmatpush1.bf16.msra.mxu0 0
    %223 = vmatprep.subr.bf16.mxu0 0
    %224 = vmatpush1.bf16.msra.mxu0 0
    %225 = vmatprep.subr.bf16.mxu0 0
    %226 = vmatpush1.bf16.msra.mxu0 0
    %227 = vmatprep.subr.bf16.mxu0 0
    %228 = vmatpush1.bf16.msra.mxu0 0
    %229 = vmatprep.subr.bf16.mxu0 0
    %230 = vmatpush1.bf16.msra.mxu0 0
    %231 = vmatprep.mubr.bf16.mxu0 0
    %232 = vmatmul.mubr.bf16.gmra.mrb[0].mxu0 %v184
    %v233 = vpop.f32.mrb[0].mxu0
    %v234 = vadd.f32 %v125, %v233
    %v235 = vpop.f32.mrb[0].mxu0
    %v236 = vadd.f32 %v127, %v235
    %v237 = vpop.f32.mrb[0].mxu0
    %v238 = vpop.f32.mrb[0].mxu0
    %239 = vdwg.mxu0
    %240 = vmatprep.subr.bf16.mxu0 %v197
    %241 = vmatpush1.bf16.msra.mxu0 %v194
    %242 = vmatprep.subr.bf16.mxu0 0
    %243 = vmatpush1.bf16.msra.mxu0 0
    %244 = vmatprep.subr.bf16.mxu0 0
    %245 = vmatpush1.bf16.msra.mxu0 0
    %246 = vmatprep.subr.bf16.mxu0 0
    %247 = vmatpush1.bf16.msra.mxu0 0
    %248 = vmatprep.subr.bf16.mxu0 0
    %249 = vmatpush1.bf16.msra.mxu0 0
    %250 = vmatprep.subr.bf16.mxu0 0
    %251 = vmatpush1.bf16.msra.mxu0 0
    %252 = vmatprep.subr.bf16.mxu0 0
    %253 = vmatpush1.bf16.msra.mxu0 0
    %254 = vmatprep.subr.bf16.mxu0 0
    %255 = vmatpush1.bf16.msra.mxu0 0
    %256 = vmatprep.subr.bf16.mxu0 0
    %257 = vmatpush1.bf16.msra.mxu0 0
    %258 = vmatprep.subr.bf16.mxu0 0
    %259 = vmatpush1.bf16.msra.mxu0 0
    %260 = vmatprep.subr.bf16.mxu0 0
    %261 = vmatpush1.bf16.msra.mxu0 0
    %262 = vmatprep.subr.bf16.mxu0 0
    %263 = vmatpush1.bf16.msra.mxu0 0
    %264 = vmatprep.subr.bf16.mxu0 0
    %265 = vmatpush1.bf16.msra.mxu0 0
    %266 = vmatprep.subr.bf16.mxu0 0
    %267 = vmatpush1.bf16.msra.mxu0 0
    %268 = vmatprep.subr.bf16.mxu0 0
    %269 = vmatpush1.bf16.msra.mxu0 0
    %270 = vmatprep.subr.bf16.mxu0 0
    %271 = vmatpush1.bf16.msra.mxu0 0
    %272 = vmatprep.mubr.bf16.mxu0 0
    %273 = vmatmul.mubr.bf16.gmra.mrb[0].mxu0 %v184
    %v274 = vpop.f32.mrb[0].mxu0
    %v275 = vadd.f32 %v166, %v274
    %v276 = vpop.f32.mrb[0].mxu0
    %v277 = vadd.f32 %v168, %v276
    %v278 = vpop.f32.mrb[0].mxu0
    %v279 = vpop.f32.mrb[0].mxu0
    %280 = vdwg.mxu0
    %v281 = vld [vmem:[%s4] sm:$0xf]
    %v283 = vlaneseq
    %v284 = vshrl.u32 %v283, 7
    %v285 = vsub.s32 0, %v284
    %v286 = vrot.slane %v281, %v285
    %v287 = vlaneseq
    %v288 = vshrl.u32 %v287, 7
    %v289 = vsub.s32 1, %v288
    %v290 = vrot.slane %v281, %v289
    %v291 = vlaneseq
    %v292 = vshrl.u32 %v291, 7
    %v293 = vsub.s32 2, %v292
    %v294 = vrot.slane %v281, %v293
    %v295 = vlaneseq
    %v296 = vshrl.u32 %v295, 7
    %v297 = vsub.s32 3, %v296
    %v298 = vrot.slane %v281, %v297
    %v303 = vadd.f32 %v234, %v286
    %v304 = vadd.f32 %v236, %v290
    %v305 = vadd.f32 %v275, %v294
    %v306 = vadd.f32 %v277, %v298
    %v307 = vmax.f32 %v303, 0.0
    %v308 = vmax.f32 %v304, 0.0
    %v309 = vmax.f32 %v305, 0.0
    %v310 = vmax.f32 %v306, 0.0
    %v311 = vpack.c.bf16 %v307, %v307
    %v312 = vpack.c.bf16 %v308, %v308
    %v313 = vpack.c.bf16 %v309, %v309
    %v314 = vpack.c.bf16 %v310, %v310
    %v315 = vld [vmem:[#allocation3] sm:$0xff]
    %v316 = vld [vmem:[#allocation3 + $0x8] sm:$0xf]
    %v317 = vld [vmem:[#allocation3 + $0xc] sm:$0xff]
    %v318 = vld [vmem:[#allocation3 + $0x14] sm:$0xf]
    %v319 = vld [vmem:[#allocation3 + $0x18] sm:$0xff]
    %v320 = vld [vmem:[#allocation3 + $0x20] sm:$0xf]
    %v321 = vld [vmem:[#allocation3 + $0x24] sm:$0xff]
    %v322 = vld [vmem:[#allocation3 + $0x2c] sm:$0xf]
    %v323 = vld [vmem:[#allocation3 + $0x30] sm:$0xff]
    %v324 = vld [vmem:[#allocation3 + $0x38] sm:$0xf]
    %v325 = vld [vmem:[#allocation3 + $0x3c] sm:$0xff]
    %v326 = vld [vmem:[#allocation3 + $0x44] sm:$0xf]
    %v327 = vld [vmem:[#allocation3 + $0x48] sm:$0xff]
    %v328 = vld [vmem:[#allocation3 + $0x50] sm:$0xf]
    %v329 = vld [vmem:[#allocation3 + $0x54] sm:$0xff]
    %v330 = vld [vmem:[#allocation3 + $0x5c] sm:$0xf]
    %v331 = vld [vmem:[#allocation3 + $0x60] sm:$0xff]
    %v332 = vld [vmem:[#allocation3 + $0x68] sm:$0xf]
    %v333 = vld [vmem:[#allocation3 + $0x6c] sm:$0xff]
    %v334 = vld [vmem:[#allocation3 + $0x74] sm:$0xf]
    %v335 = vld [vmem:[#allocation3 + $0x78] sm:$0xff]
    %v336 = vld [vmem:[#allocation3 + $0x80] sm:$0xf]
    %v337 = vld [vmem:[#allocation3 + $0x84] sm:$0xff]
    %v338 = vld [vmem:[#allocation3 + $0x8c] sm:$0xf]
    %v339 = vld [vmem:[#allocation3 + $0x90] sm:$0xff]
    %v340 = vld [vmem:[#allocation3 + $0x98] sm:$0xf]
    %v341 = vld [vmem:[#allocation3 + $0x9c] sm:$0xff]
    %v342 = vld [vmem:[#allocation3 + $0xa4] sm:$0xf]
    %v343 = vld [vmem:[#allocation3 + $0xa8] sm:$0xff]
    %v344 = vld [vmem:[#allocation3 + $0xb0] sm:$0xf]
    %v345 = vld [vmem:[#allocation3 + $0xb4] sm:$0xff]
    %v346 = vld [vmem:[#allocation3 + $0xbc] sm:$0xf]
    %v347 = vld [vmem:[#allocation3 + $0xc0] sm:$0xff]
    %v348 = vld [vmem:[#allocation3 + $0xc8] sm:$0xf]
    %v349 = vld [vmem:[#allocation3 + $0xcc] sm:$0xff]
    %v350 = vld [vmem:[#allocation3 + $0xd4] sm:$0xf]
    %v351 = vld [vmem:[#allocation3 + $0xd8] sm:$0xff]
    %v352 = vld [vmem:[#allocation3 + $0xe0] sm:$0xf]
    %v353 = vld [vmem:[#allocation3 + $0xe4] sm:$0xff]
    %v354 = vld [vmem:[#allocation3 + $0xec] sm:$0xf]
    %v355 = vld [vmem:[#allocation3 + $0xf0] sm:$0xff]
    %v356 = vld [vmem:[#allocation3 + $0xf8] sm:$0xf]
    %v357 = vld [vmem:[#allocation3 + $0xfc] sm:$0xff]
    %v358 = vld [vmem:[#allocation3 + $0x104] sm:$0xf]
    %v359 = vld [vmem:[#allocation3 + $0x108] sm:$0xff]
    %v360 = vld [vmem:[#allocation3 + $0x110] sm:$0xf]
    %v361 = vld [vmem:[#allocation3 + $0x114] sm:$0xff]
    %v362 = vld [vmem:[#allocation3 + $0x11c] sm:$0xf]
    %v363 = vld [vmem:[#allocation3 + $0x120] sm:$0xff]
    %v364 = vld [vmem:[#allocation3 + $0x128] sm:$0xf]
    %v365 = vld [vmem:[#allocation3 + $0x12c] sm:$0xff]
    %v366 = vld [vmem:[#allocation3 + $0x134] sm:$0xf]
    %v367 = vld [vmem:[#allocation3 + $0x138] sm:$0xff]
    %v368 = vld [vmem:[#allocation3 + $0x140] sm:$0xf]
    %v369 = vld [vmem:[#allocation3 + $0x144] sm:$0xff]
    %v370 = vld [vmem:[#allocation3 + $0x14c] sm:$0xf]
    %v371 = vld [vmem:[#allocation3 + $0x150] sm:$0xff]
    %v372 = vld [vmem:[#allocation3 + $0x158] sm:$0xf]
    %v373 = vld [vmem:[#allocation3 + $0x15c] sm:$0xff]
    %v374 = vld [vmem:[#allocation3 + $0x164] sm:$0xf]
    %v375 = vld [vmem:[#allocation3 + $0x168] sm:$0xff]
    %v376 = vld [vmem:[#allocation3 + $0x170] sm:$0xf]
    %v377 = vld [vmem:[#allocation3 + $0x174] sm:$0xff]
    %v378 = vld [vmem:[#allocation3 + $0x17c] sm:$0xf]
    %v379 = vld [vmem:[#allocation3 + $0x180] sm:$0xff]
    %v380 = vld [vmem:[#allocation3 + $0x188] sm:$0xf]
    %v381 = vld [vmem:[#allocation3 + $0x18c] sm:$0xff]
    %v382 = vld [vmem:[#allocation3 + $0x194] sm:$0xf]
    %v383 = vld [vmem:[#allocation3 + $0x198] sm:$0xff]
    %v384 = vld [vmem:[#allocation3 + $0x1a0] sm:$0xf]
    %v385 = vld [vmem:[#allocation3 + $0x1a4] sm:$0xff]
    %v386 = vld [vmem:[#allocation3 + $0x1ac] sm:$0xf]
    %v387 = vld [vmem:[#allocation3 + $0x1b0] sm:$0xff]
    %v388 = vld [vmem:[#allocation3 + $0x1b8] sm:$0xf]
    %v389 = vld [vmem:[#allocation3 + $0x1bc] sm:$0xff]
    %v390 = vld [vmem:[#allocation3 + $0x1c4] sm:$0xf]
    %v391 = vld [vmem:[#allocation3 + $0x1c8] sm:$0xff]
    %v392 = vld [vmem:[#allocation3 + $0x1d0] sm:$0xf]
    %v393 = vld [vmem:[#allocation3 + $0x1d4] sm:$0xff]
    %v394 = vld [vmem:[#allocation3 + $0x1dc] sm:$0xf]
    %v395 = vld [vmem:[#allocation3 + $0x1e0] sm:$0xff]
    %v396 = vld [vmem:[#allocation3 + $0x1e8] sm:$0xf]
    %v397 = vld [vmem:[#allocation3 + $0x1ec] sm:$0xff]
    %v398 = vld [vmem:[#allocation3 + $0x1f4] sm:$0xf]
    %v399 = vld [vmem:[#allocation3 + $0x1f8] sm:$0xff]
    %v400 = vld [vmem:[#allocation3 + $0x200] sm:$0xf]
    %v401 = vld [vmem:[#allocation3 + $0x204] sm:$0xff]
    %v402 = vld [vmem:[#allocation3 + $0x20c] sm:$0xf]
    %v403 = vld [vmem:[#allocation3 + $0x210] sm:$0xff]
    %v404 = vld [vmem:[#allocation3 + $0x218] sm:$0xf]
    %v405 = vld [vmem:[#allocation3 + $0x21c] sm:$0xff]
    %v406 = vld [vmem:[#allocation3 + $0x224] sm:$0xf]
    %v407 = vld [vmem:[#allocation3 + $0x228] sm:$0xff]
    %v408 = vld [vmem:[#allocation3 + $0x230] sm:$0xf]
    %v409 = vld [vmem:[#allocation3 + $0x234] sm:$0xff]
    %v410 = vld [vmem:[#allocation3 + $0x23c] sm:$0xf]
    %v411 = vld [vmem:[#allocation3 + $0x240] sm:$0xff]
    %v412 = vld [vmem:[#allocation3 + $0x248] sm:$0xf]
    %v413 = vld [vmem:[#allocation3 + $0x24c] sm:$0xff]
    %v414 = vld [vmem:[#allocation3 + $0x254] sm:$0xf]
    %v415 = vld [vmem:[#allocation3 + $0x258] sm:$0xff]
    %v416 = vld [vmem:[#allocation3 + $0x260] sm:$0xf]
    %v417 = vld [vmem:[#allocation3 + $0x264] sm:$0xff]
    %v418 = vld [vmem:[#allocation3 + $0x26c] sm:$0xf]
    %v419 = vld [vmem:[#allocation3 + $0x270] sm:$0xff]
    %v420 = vld [vmem:[#allocation3 + $0x278] sm:$0xf]
    %v421 = vld [vmem:[#allocation3 + $0x27c] sm:$0xff]
    %v422 = vld [vmem:[#allocation3 + $0x284] sm:$0xf]
    %v423 = vld [vmem:[#allocation3 + $0x288] sm:$0xff]
    %v424 = vld [vmem:[#allocation3 + $0x290] sm:$0xf]
    %v425 = vld [vmem:[#allocation3 + $0x294] sm:$0xff]
    %v426 = vld [vmem:[#allocation3 + $0x29c] sm:$0xf]
    %v427 = vld [vmem:[#allocation3 + $0x2a0] sm:$0xff]
    %v428 = vld [vmem:[#allocation3 + $0x2a8] sm:$0xf]
    %v429 = vld [vmem:[#allocation3 + $0x2ac] sm:$0xff]
    %v430 = vld [vmem:[#allocation3 + $0x2b4] sm:$0xf]
    %v431 = vld [vmem:[#allocation3 + $0x2b8] sm:$0xff]
    %v432 = vld [vmem:[#allocation3 + $0x2c0] sm:$0xf]
    %v433 = vld [vmem:[#allocation3 + $0x2c4] sm:$0xff]
    %v434 = vld [vmem:[#allocation3 + $0x2cc] sm:$0xf]
    %v435 = vld [vmem:[#allocation3 + $0x2d0] sm:$0xff]
    %v436 = vld [vmem:[#allocation3 + $0x2d8] sm:$0xf]
    %v437 = vld [vmem:[#allocation3 + $0x2dc] sm:$0xff]
    %v438 = vld [vmem:[#allocation3 + $0x2e4] sm:$0xf]
    %v439 = vld [vmem:[#allocation3 + $0x2e8] sm:$0xff]
    %v440 = vld [vmem:[#allocation3 + $0x2f0] sm:$0xf]
    %v441 = vld [vmem:[#allocation3 + $0x2f4] sm:$0xff]
    %v442 = vld [vmem:[#allocation3 + $0x2fc] sm:$0xf]
    %v443 = vld [vmem:[%s6] sm:$0x7]
    %v445 = vlaneseq
    %v446 = vshrl.u32 %v445, 7
    %v447 = vsub.s32 0, %v446
    %v448 = vrot.slane %v443, %v447
    %v449 = vlaneseq
    %v450 = vshrl.u32 %v449, 7
    %v451 = vsub.s32 1, %v450
    %v452 = vrot.slane %v443, %v451
    %v453 = vlaneseq
    %v454 = vshrl.u32 %v453, 7
    %v455 = vsub.s32 2, %v454
    %v456 = vrot.slane %v443, %v455
    %v588 = vunpack.c.l.b16 %v315
    %v589 = vunpack.c.h.b16 %v315
    %v590 = vunpack.c.l.b16 %v316
    %v591 = vunpack.c.l.b16 %v317
    %v592 = vunpack.c.h.b16 %v317
    %v593 = vunpack.c.l.b16 %v318
    %v594 = vunpack.c.l.b16 %v319
    %v595 = vunpack.c.h.b16 %v319
    %v596 = vunpack.c.l.b16 %v320
    %v597 = vunpack.c.l.b16 %v321
    %v598 = vunpack.c.h.b16 %v321
    %v599 = vunpack.c.l.b16 %v322
    %v600 = vunpack.c.l.b16 %v323
    %v601 = vunpack.c.h.b16 %v323
    %v602 = vunpack.c.l.b16 %v324
    %v603 = vunpack.c.l.b16 %v325
    %v604 = vunpack.c.h.b16 %v325
    %v605 = vunpack.c.l.b16 %v326
    %v606 = vunpack.c.l.b16 %v327
    %v607 = vunpack.c.h.b16 %v327
    %v608 = vunpack.c.l.b16 %v328
    %v609 = vunpack.c.l.b16 %v329
    %v610 = vunpack.c.h.b16 %v329
    %v611 = vunpack.c.l.b16 %v330
    %v612 = vunpack.c.l.b16 %v331
    %v613 = vunpack.c.h.b16 %v331
    %v614 = vunpack.c.l.b16 %v332
    %v615 = vunpack.c.l.b16 %v333
    %v616 = vunpack.c.h.b16 %v333
    %v617 = vunpack.c.l.b16 %v334
    %v618 = vunpack.c.l.b16 %v335
    %v619 = vunpack.c.h.b16 %v335
    %v620 = vunpack.c.l.b16 %v336
    %v621 = vunpack.c.l.b16 %v337
    %v622 = vunpack.c.h.b16 %v337
    %v623 = vunpack.c.l.b16 %v338
    %v624 = vunpack.c.l.b16 %v339
    %v625 = vunpack.c.h.b16 %v339
    %v626 = vunpack.c.l.b16 %v340
    %v627 = vunpack.c.l.b16 %v341
    %v628 = vunpack.c.h.b16 %v341
    %v629 = vunpack.c.l.b16 %v342
    %v630 = vunpack.c.l.b16 %v343
    %v631 = vunpack.c.h.b16 %v343
    %v632 = vunpack.c.l.b16 %v344
    %v633 = vunpack.c.l.b16 %v345
    %v634 = vunpack.c.h.b16 %v345
    %v635 = vunpack.c.l.b16 %v346
    %v636 = vunpack.c.l.b16 %v347
    %v637 = vunpack.c.h.b16 %v347
    %v638 = vunpack.c.l.b16 %v348
    %v639 = vunpack.c.l.b16 %v349
    %v640 = vunpack.c.h.b16 %v349
    %v641 = vunpack.c.l.b16 %v350
    %v642 = vunpack.c.l.b16 %v351
    %v643 = vunpack.c.h.b16 %v351
    %v644 = vunpack.c.l.b16 %v352
    %v645 = vunpack.c.l.b16 %v353
    %v646 = vunpack.c.h.b16 %v353
    %v647 = vunpack.c.l.b16 %v354
    %v648 = vunpack.c.l.b16 %v355
    %v649 = vunpack.c.h.b16 %v355
    %v650 = vunpack.c.l.b16 %v356
    %v651 = vunpack.c.l.b16 %v357
    %v652 = vunpack.c.h.b16 %v357
    %v653 = vunpack.c.l.b16 %v358
    %v654 = vunpack.c.l.b16 %v359
    %v655 = vunpack.c.h.b16 %v359
    %v656 = vunpack.c.l.b16 %v360
    %v657 = vunpack.c.l.b16 %v361
    %v658 = vunpack.c.h.b16 %v361
    %v659 = vunpack.c.l.b16 %v362
    %v660 = vunpack.c.l.b16 %v363
    %v661 = vunpack.c.h.b16 %v363
    %v662 = vunpack.c.l.b16 %v364
    %v663 = vunpack.c.l.b16 %v365
    %v664 = vunpack.c.h.b16 %v365
    %v665 = vunpack.c.l.b16 %v366
    %v666 = vunpack.c.l.b16 %v367
    %v667 = vunpack.c.h.b16 %v367
    %v668 = vunpack.c.l.b16 %v368
    %v669 = vunpack.c.l.b16 %v369
    %v670 = vunpack.c.h.b16 %v369
    %v671 = vunpack.c.l.b16 %v370
    %v672 = vunpack.c.l.b16 %v371
    %v673 = vunpack.c.h.b16 %v371
    %v674 = vunpack.c.l.b16 %v372
    %v675 = vunpack.c.l.b16 %v373
    %v676 = vunpack.c.h.b16 %v373
    %v677 = vunpack.c.l.b16 %v374
    %v678 = vunpack.c.l.b16 %v375
    %v679 = vunpack.c.h.b16 %v375
    %v680 = vunpack.c.l.b16 %v376
    %v681 = vunpack.c.l.b16 %v377
    %v682 = vunpack.c.h.b16 %v377
    %v683 = vunpack.c.l.b16 %v378
    %v684 = vunpack.c.l.b16 %v379
    %v685 = vunpack.c.h.b16 %v379
    %v686 = vunpack.c.l.b16 %v380
    %v687 = vunpack.c.l.b16 %v381
    %v688 = vunpack.c.h.b16 %v381
    %v689 = vunpack.c.l.b16 %v382
    %v690 = vunpack.c.l.b16 %v383
    %v691 = vunpack.c.h.b16 %v383
    %v692 = vunpack.c.l.b16 %v384
    %v693 = vunpack.c.l.b16 %v385
    %v694 = vunpack.c.h.b16 %v385
    %v695 = vunpack.c.l.b16 %v386
    %v696 = vunpack.c.l.b16 %v387
    %v697 = vunpack.c.h.b16 %v387
    %v698 = vunpack.c.l.b16 %v388
    %v699 = vunpack.c.l.b16 %v389
    %v700 = vunpack.c.h.b16 %v389
    %v701 = vunpack.c.l.b16 %v390
    %v702 = vunpack.c.l.b16 %v391
    %v703 = vunpack.c.h.b16 %v391
    %v704 = vunpack.c.l.b16 %v392
    %v705 = vunpack.c.l.b16 %v393
    %v706 = vunpack.c.h.b16 %v393
    %v707 = vunpack.c.l.b16 %v394
    %v708 = vunpack.c.l.b16 %v395
    %v709 = vunpack.c.h.b16 %v395
    %v710 = vunpack.c.l.b16 %v396
    %v711 = vunpack.c.l.b16 %v397
    %v712 = vunpack.c.h.b16 %v397
    %v713 = vunpack.c.l.b16 %v398
    %v714 = vunpack.c.l.b16 %v399
    %v715 = vunpack.c.h.b16 %v399
    %v716 = vunpack.c.l.b16 %v400
    %v717 = vunpack.c.l.b16 %v401
    %v718 = vunpack.c.h.b16 %v401
    %v719 = vunpack.c.l.b16 %v402
    %v720 = vunpack.c.l.b16 %v403
    %v721 = vunpack.c.h.b16 %v403
    %v722 = vunpack.c.l.b16 %v404
    %v723 = vunpack.c.l.b16 %v405
    %v724 = vunpack.c.h.b16 %v405
    %v725 = vunpack.c.l.b16 %v406
    %v726 = vunpack.c.l.b16 %v407
    %v727 = vunpack.c.h.b16 %v407
    %v728 = vunpack.c.l.b16 %v408
    %v729 = vunpack.c.l.b16 %v409
    %v730 = vunpack.c.h.b16 %v409
    %v731 = vunpack.c.l.b16 %v410
    %v732 = vunpack.c.l.b16 %v411
    %v733 = vunpack.c.h.b16 %v411
    %v734 = vunpack.c.l.b16 %v412
    %v735 = vunpack.c.l.b16 %v413
    %v736 = vunpack.c.h.b16 %v413
    %v737 = vunpack.c.l.b16 %v414
    %v738 = vunpack.c.l.b16 %v415
    %v739 = vunpack.c.h.b16 %v415
    %v740 = vunpack.c.l.b16 %v416
    %v741 = vunpack.c.l.b16 %v417
    %v742 = vunpack.c.h.b16 %v417
    %v743 = vunpack.c.l.b16 %v418
    %v744 = vunpack.c.l.b16 %v419
    %v745 = vunpack.c.h.b16 %v419
    %v746 = vunpack.c.l.b16 %v420
    %v747 = vunpack.c.l.b16 %v421
    %v748 = vunpack.c.h.b16 %v421
    %v749 = vunpack.c.l.b16 %v422
    %v750 = vunpack.c.l.b16 %v423
    %v751 = vunpack.c.h.b16 %v423
    %v752 = vunpack.c.l.b16 %v424
    %v753 = vunpack.c.l.b16 %v425
    %v754 = vunpack.c.h.b16 %v425
    %v755 = vunpack.c.l.b16 %v426
    %v756 = vunpack.c.l.b16 %v427
    %v757 = vunpack.c.h.b16 %v427
    %v758 = vunpack.c.l.b16 %v428
    %v759 = vunpack.c.l.b16 %v429
    %v760 = vunpack.c.h.b16 %v429
    %v761 = vunpack.c.l.b16 %v430
    %v762 = vunpack.c.l.b16 %v431
    %v763 = vunpack.c.h.b16 %v431
    %v764 = vunpack.c.l.b16 %v432
    %v765 = vunpack.c.l.b16 %v433
    %v766 = vunpack.c.h.b16 %v433
    %v767 = vunpack.c.l.b16 %v434
    %v768 = vunpack.c.l.b16 %v435
    %v769 = vunpack.c.h.b16 %v435
    %v770 = vunpack.c.l.b16 %v436
    %v771 = vunpack.c.l.b16 %v437
    %v772 = vunpack.c.h.b16 %v437
    %v773 = vunpack.c.l.b16 %v438
    %v774 = vunpack.c.l.b16 %v439
    %v775 = vunpack.c.h.b16 %v439
    %v776 = vunpack.c.l.b16 %v440
    %v777 = vunpack.c.l.b16 %v441
    %v778 = vunpack.c.h.b16 %v441
    %v779 = vunpack.c.l.b16 %v442
    %v780 = vpack.c.b16 %v591, %v588
    %v781 = vpack.c.b16 %v592, %v589
    %v782 = vpack.c.b16 %v593, %v590
    %v783 = vpack.c.b16 %v597, %v594
    %v784 = vpack.c.b16 %v598, %v595
    %v785 = vpack.c.b16 %v599, %v596
    %v786 = vpack.c.b16 %v603, %v600
    %v787 = vpack.c.b16 %v604, %v601
    %v788 = vpack.c.b16 %v605, %v602
    %v789 = vpack.c.b16 %v609, %v606
    %v790 = vpack.c.b16 %v610, %v607
    %v791 = vpack.c.b16 %v611, %v608
    %v792 = vpack.c.b16 %v615, %v612
    %v793 = vpack.c.b16 %v616, %v613
    %v794 = vpack.c.b16 %v617, %v614
    %v795 = vpack.c.b16 %v621, %v618
    %v796 = vpack.c.b16 %v622, %v619
    %v797 = vpack.c.b16 %v623, %v620
    %v798 = vpack.c.b16 %v627, %v624
    %v799 = vpack.c.b16 %v628, %v625
    %v800 = vpack.c.b16 %v629, %v626
    %v801 = vpack.c.b16 %v633, %v630
    %v802 = vpack.c.b16 %v634, %v631
    %v803 = vpack.c.b16 %v635, %v632
    %v804 = vpack.c.b16 %v639, %v636
    %v805 = vpack.c.b16 %v640, %v637
    %v806 = vpack.c.b16 %v641, %v638
    %v807 = vpack.c.b16 %v645, %v642
    %v808 = vpack.c.b16 %v646, %v643
    %v809 = vpack.c.b16 %v647, %v644
    %v810 = vpack.c.b16 %v651, %v648
    %v811 = vpack.c.b16 %v652, %v649
    %v812 = vpack.c.b16 %v653, %v650
    %v813 = vpack.c.b16 %v657, %v654
    %v814 = vpack.c.b16 %v658, %v655
    %v815 = vpack.c.b16 %v659, %v656
    %v816 = vpack.c.b16 %v663, %v660
    %v817 = vpack.c.b16 %v664, %v661
    %v818 = vpack.c.b16 %v665, %v662
    %v819 = vpack.c.b16 %v669, %v666
    %v820 = vpack.c.b16 %v670, %v667
    %v821 = vpack.c.b16 %v671, %v668
    %v822 = vpack.c.b16 %v675, %v672
    %v823 = vpack.c.b16 %v676, %v673
    %v824 = vpack.c.b16 %v677, %v674
    %v825 = vpack.c.b16 %v681, %v678
    %v826 = vpack.c.b16 %v682, %v679
    %v827 = vpack.c.b16 %v683, %v680
    %v828 = vpack.c.b16 %v687, %v684
    %v829 = vpack.c.b16 %v688, %v685
    %v830 = vpack.c.b16 %v689, %v686
    %v831 = vpack.c.b16 %v693, %v690
    %v832 = vpack.c.b16 %v694, %v691
    %v833 = vpack.c.b16 %v695, %v692
    %v834 = vpack.c.b16 %v699, %v696
    %v835 = vpack.c.b16 %v700, %v697
    %v836 = vpack.c.b16 %v701, %v698
    %v837 = vpack.c.b16 %v705, %v702
    %v838 = vpack.c.b16 %v706, %v703
    %v839 = vpack.c.b16 %v707, %v704
    %v840 = vpack.c.b16 %v711, %v708
    %v841 = vpack.c.b16 %v712, %v709
    %v842 = vpack.c.b16 %v713, %v710
    %v843 = vpack.c.b16 %v717, %v714
    %v844 = vpack.c.b16 %v718, %v715
    %v845 = vpack.c.b16 %v719, %v716
    %v846 = vpack.c.b16 %v723, %v720
    %v847 = vpack.c.b16 %v724, %v721
    %v848 = vpack.c.b16 %v725, %v722
    %v849 = vpack.c.b16 %v729, %v726
    %v850 = vpack.c.b16 %v730, %v727
    %v851 = vpack.c.b16 %v731, %v728
    %v852 = vpack.c.b16 %v735, %v732
    %v853 = vpack.c.b16 %v736, %v733
    %v854 = vpack.c.b16 %v737, %v734
    %v855 = vpack.c.b16 %v741, %v738
    %v856 = vpack.c.b16 %v742, %v739
    %v857 = vpack.c.b16 %v743, %v740
    %v858 = vpack.c.b16 %v747, %v744
    %v859 = vpack.c.b16 %v748, %v745
    %v860 = vpack.c.b16 %v749, %v746
    %v861 = vpack.c.b16 %v753, %v750
    %v862 = vpack.c.b16 %v754, %v751
    %v863 = vpack.c.b16 %v755, %v752
    %v864 = vpack.c.b16 %v759, %v756
    %v865 = vpack.c.b16 %v760, %v757
    %v866 = vpack.c.b16 %v761, %v758
    %v867 = vpack.c.b16 %v765, %v762
    %v868 = vpack.c.b16 %v766, %v763
    %v869 = vpack.c.b16 %v767, %v764
    %v870 = vpack.c.b16 %v771, %v768
    %v871 = vpack.c.b16 %v772, %v769
    %v872 = vpack.c.b16 %v773, %v770
    %v873 = vpack.c.b16 %v777, %v774
    %v874 = vpack.c.b16 %v778, %v775
    %v875 = vpack.c.b16 %v779, %v776
    %972 = vmatprep.subr.bf16.mxu0 %v781
    %973 = vmatpush1.bf16.msra.mxu0 %v780
    %974 = vmatprep.subr.bf16.mxu0 %v784
    %975 = vmatpush1.bf16.msra.mxu0 %v783
    %976 = vmatprep.subr.bf16.mxu0 %v787
    %977 = vmatpush1.bf16.msra.mxu0 %v786
    %978 = vmatprep.subr.bf16.mxu0 %v790
    %979 = vmatpush1.bf16.msra.mxu0 %v789
    %980 = vmatprep.subr.bf16.mxu0 %v793
    %981 = vmatpush1.bf16.msra.mxu0 %v792
    %982 = vmatprep.subr.bf16.mxu0 %v796
    %983 = vmatpush1.bf16.msra.mxu0 %v795
    %984 = vmatprep.subr.bf16.mxu0 %v799
    %985 = vmatpush1.bf16.msra.mxu0 %v798
    %986 = vmatprep.subr.bf16.mxu0 %v802
    %987 = vmatpush1.bf16.msra.mxu0 %v801
    %988 = vmatprep.subr.bf16.mxu0 %v805
    %989 = vmatpush1.bf16.msra.mxu0 %v804
    %990 = vmatprep.subr.bf16.mxu0 %v808
    %991 = vmatpush1.bf16.msra.mxu0 %v807
    %992 = vmatprep.subr.bf16.mxu0 %v811
    %993 = vmatpush1.bf16.msra.mxu0 %v810
    %994 = vmatprep.subr.bf16.mxu0 %v814
    %995 = vmatpush1.bf16.msra.mxu0 %v813
    %996 = vmatprep.subr.bf16.mxu0 %v817
    %997 = vmatpush1.bf16.msra.mxu0 %v816
    %998 = vmatprep.subr.bf16.mxu0 %v820
    %999 = vmatpush1.bf16.msra.mxu0 %v819
    %1000 = vmatprep.subr.bf16.mxu0 %v823
    %1001 = vmatpush1.bf16.msra.mxu0 %v822
    %1002 = vmatprep.subr.bf16.mxu0 %v826
    %1003 = vmatpush1.bf16.msra.mxu0 %v825
    %1004 = vmatprep.mubr.bf16.mxu0 %v312
    %1005 = vmatmul.mubr.bf16.gmra.mrb[0].mxu0 %v311
    %v1006 = vpop.f32.mrb[0].mxu0
    %v1007 = vadd.f32 %v448, %v1006
    %v1008 = vpop.f32.mrb[0].mxu0
    %v1009 = vadd.f32 %v452, %v1008
    %v1010 = vpop.f32.mrb[0].mxu0
    %v1011 = vpop.f32.mrb[0].mxu0
    %1012 = vdwg.mxu0
    %1013 = vmatprep.subr.bf16.mxu0 %v829
    %1014 = vmatpush1.bf16.msra.mxu0 %v828
    %1015 = vmatprep.subr.bf16.mxu0 %v832
    %1016 = vmatpush1.bf16.msra.mxu0 %v831
    %1017 = vmatprep.subr.bf16.mxu0 %v835
    %1018 = vmatpush1.bf16.msra.mxu0 %v834
    %1019 = vmatprep.subr.bf16.mxu0 %v838
    %1020 = vmatpush1.bf16.msra.mxu0 %v837
    %1021 = vmatprep.subr.bf16.mxu0 %v841
    %1022 = vmatpush1.bf16.msra.mxu0 %v840
    %1023 = vmatprep.subr.bf16.mxu0 %v844
    %1024 = vmatpush1.bf16.msra.mxu0 %v843
    %1025 = vmatprep.subr.bf16.mxu0 %v847
    %1026 = vmatpush1.bf16.msra.mxu0 %v846
    %1027 = vmatprep.subr.bf16.mxu0 %v850
    %1028 = vmatpush1.bf16.msra.mxu0 %v849
    %1029 = vmatprep.subr.bf16.mxu0 %v853
    %1030 = vmatpush1.bf16.msra.mxu0 %v852
    %1031 = vmatprep.subr.bf16.mxu0 %v856
    %1032 = vmatpush1.bf16.msra.mxu0 %v855
    %1033 = vmatprep.subr.bf16.mxu0 %v859
    %1034 = vmatpush1.bf16.msra.mxu0 %v858
    %1035 = vmatprep.subr.bf16.mxu0 %v862
    %1036 = vmatpush1.bf16.msra.mxu0 %v861
    %1037 = vmatprep.subr.bf16.mxu0 %v865
    %1038 = vmatpush1.bf16.msra.mxu0 %v864
    %1039 = vmatprep.subr.bf16.mxu0 %v868
    %1040 = vmatpush1.bf16.msra.mxu0 %v867
    %1041 = vmatprep.subr.bf16.mxu0 %v871
    %1042 = vmatpush1.bf16.msra.mxu0 %v870
    %1043 = vmatprep.subr.bf16.mxu0 %v874
    %1044 = vmatpush1.bf16.msra.mxu0 %v873
    %1045 = vmatprep.mubr.bf16.mxu0 %v314
    %1046 = vmatmul.mubr.bf16.gmra.mrb[0].mxu0 %v313
    %v1047 = vpop.f32.mrb[0].mxu0
    %v1048 = vadd.f32 %v1007, %v1047
    %v1049 = vpop.f32.mrb[0].mxu0
    %v1050 = vadd.f32 %v1009, %v1049
    %v1051 = vpop.f32.mrb[0].mxu0
    %v1052 = vpop.f32.mrb[0].mxu0
    %1053 = vdwg.mxu0
    %1054 = vmatprep.subr.bf16.mxu0 0
    %1055 = vmatpush1.bf16.msra.mxu0 %v782
    %1056 = vmatprep.subr.bf16.mxu0 0
    %1057 = vmatpush1.bf16.msra.mxu0 %v785
    %1058 = vmatprep.subr.bf16.mxu0 0
    %1059 = vmatpush1.bf16.msra.mxu0 %v788
    %1060 = vmatprep.subr.bf16.mxu0 0
    %1061 = vmatpush1.bf16.msra.mxu0 %v791
    %1062 = vmatprep.subr.bf16.mxu0 0
    %1063 = vmatpush1.bf16.msra.mxu0 %v794
    %1064 = vmatprep.subr.bf16.mxu0 0
    %1065 = vmatpush1.bf16.msra.mxu0 %v797
    %1066 = vmatprep.subr.bf16.mxu0 0
    %1067 = vmatpush1.bf16.msra.mxu0 %v800
    %1068 = vmatprep.subr.bf16.mxu0 0
    %1069 = vmatpush1.bf16.msra.mxu0 %v803
    %1070 = vmatprep.subr.bf16.mxu0 0
    %1071 = vmatpush1.bf16.msra.mxu0 %v806
    %1072 = vmatprep.subr.bf16.mxu0 0
    %1073 = vmatpush1.bf16.msra.mxu0 %v809
    %1074 = vmatprep.subr.bf16.mxu0 0
    %1075 = vmatpush1.bf16.msra.mxu0 %v812
    %1076 = vmatprep.subr.bf16.mxu0 0
    %1077 = vmatpush1.bf16.msra.mxu0 %v815
    %1078 = vmatprep.subr.bf16.mxu0 0
    %1079 = vmatpush1.bf16.msra.mxu0 %v818
    %1080 = vmatprep.subr.bf16.mxu0 0
    %1081 = vmatpush1.bf16.msra.mxu0 %v821
    %1082 = vmatprep.subr.bf16.mxu0 0
    %1083 = vmatpush1.bf16.msra.mxu0 %v824
    %1084 = vmatprep.subr.bf16.mxu0 0
    %1085 = vmatpush1.bf16.msra.mxu0 %v827
    %1086 = vmatprep.mubr.bf16.mxu0 %v312
    %1087 = vmatmul.mubr.bf16.gmra.mrb[0].mxu0 %v311
    %v1088 = vpop.f32.mrb[0].mxu0
    %v1089 = vadd.f32 %v456, %v1088
    %v1090 = vpop.f32.mrb[0].mxu0
    %v1091 = vpop.f32.mrb[0].mxu0
    %v1092 = vpop.f32.mrb[0].mxu0
    %1093 = vdwg.mxu0
    %1094 = vmatprep.subr.bf16.mxu0 0
    %1095 = vmatpush1.bf16.msra.mxu0 %v830
    %1096 = vmatprep.subr.bf16.mxu0 0
    %1097 = vmatpush1.bf16.msra.mxu0 %v833
    %1098 = vmatprep.subr.bf16.mxu0 0
    %1099 = vmatpush1.bf16.msra.mxu0 %v836
    %1100 = vmatprep.subr.bf16.mxu0 0
    %1101 = vmatpush1.bf16.msra.mxu0 %v839
    %1102 = vmatprep.subr.bf16.mxu0 0
    %1103 = vmatpush1.bf16.msra.mxu0 %v842
    %1104 = vmatprep.subr.bf16.mxu0 0
    %1105 = vmatpush1.bf16.msra.mxu0 %v845
    %1106 = vmatprep.subr.bf16.mxu0 0
    %1107 = vmatpush1.bf16.msra.mxu0 %v848
    %1108 = vmatprep.subr.bf16.mxu0 0
    %1109 = vmatpush1.bf16.msra.mxu0 %v851
    %1110 = vmatprep.subr.bf16.mxu0 0
    %1111 = vmatpush1.bf16.msra.mxu0 %v854
    %1112 = vmatprep.subr.bf16.mxu0 0
    %1113 = vmatpush1.bf16.msra.mxu0 %v857
    %1114 = vmatprep.subr.bf16.mxu0 0
    %1115 = vmatpush1.bf16.msra.mxu0 %v860
    %1116 = vmatprep.subr.bf16.mxu0 0
    %1117 = vmatpush1.bf16.msra.mxu0 %v863
    %1118 = vmatprep.subr.bf16.mxu0 0
    %1119 = vmatpush1.bf16.msra.mxu0 %v866
    %1120 = vmatprep.subr.bf16.mxu0 0
    %1121 = vmatpush1.bf16.msra.mxu0 %v869
    %1122 = vmatprep.subr.bf16.mxu0 0
    %1123 = vmatpush1.bf16.msra.mxu0 %v872
    %1124 = vmatprep.subr.bf16.mxu0 0
    %1125 = vmatpush1.bf16.msra.mxu0 %v875
    %1126 = vmatprep.mubr.bf16.mxu0 %v314
    %1127 = vmatmul.mubr.bf16.gmra.mrb[0].mxu0 %v313
    %v1128 = vpop.f32.mrb[0].mxu0
    %v1129 = vadd.f32 %v1089, %v1128
    %v1130 = vpop.f32.mrb[0].mxu0
    %v1131 = vpop.f32.mrb[0].mxu0
    %v1132 = vpop.f32.mrb[0].mxu0
    %1133 = vdwg.mxu0
    %v1134 = vmax.f32 %v1048, 0.0
    %v1135 = vmax.f32 %v1050, 0.0
    %v1136 = vmax.f32 %v1129, 0.0
    %v1137 = vld [vmem:[%s7] sm:$0x7]
    %v1139 = vlaneseq
    %v1140 = vshrl.u32 %v1139, 7
    %v1141 = vsub.s32 0, %v1140
    %v1142 = vrot.slane %v1137, %v1141
    %v1143 = vlaneseq
    %v1144 = vshrl.u32 %v1143, 7
    %v1145 = vsub.s32 1, %v1144
    %v1146 = vrot.slane %v1137, %v1145
    %v1147 = vlaneseq
    %v1148 = vshrl.u32 %v1147, 7
    %v1149 = vsub.s32 2, %v1148
    %v1150 = vrot.slane %v1137, %v1149
    %v1154 = vmul.f32 %v1134, %v1142
    %v1155 = vmul.f32 %v1135, %v1146
    %v1156 = vmul.f32 %v1136, %v1150
    %v1157 = vadd.f32 %v1154, %v1155
    %v1158 = vadd.f32 %v1157, %v1156
    %1159 = vadd.xlane.f32.xlu0 %v1158
    %v1160 = vpop.xlane.xlu0 %1159
    %s1161 = sld [smem:[#allocation2]]
    %v1162 = vstv %s1161
    %v1163 = vadd.f32 %v1160, %v1162
    %vm1164 = vcmask 7168
    %1165 = vst.msk [vmem:[%s9] sm:$0xff] %vm1164, %v1163
    // Predicated region
    $region42: #{critic_forward.1} parent=1 // pred_check
      _
    $region43: #{critic_forward.1} parent=1 // pred_check_branch
      %1167 = sbr.rel (0) target = $region45
    $region44: #{critic_forward.1} parent=1 // pred_region
      _
    $region45: #{critic_forward.1} parent=1 // pred_fallthru
      _
    // Predicated region
    $region46: #{critic_forward.1} parent=1 // pred_check
      _
    $region47: #{critic_forward.1} parent=1 // pred_check_branch
      %1169 = sbr.rel (0) target = $region49
    $region48: #{critic_forward.1} parent=1 // pred_region
      _
    $region49: #{critic_forward.1} parent=1 // pred_fallthru
      _
    %1170 = vsyncpa [#allocation4], 1

</llo_original>
